<compile_context>
chip_gen: v6e
topology: v6e:2x2x1
jax: 0.10.0
libtpu: 0.0.40
codegen_flags: <defaults>
</compile_context>

<pallas_src>
import jax
import jax.numpy as jnp
from jax.experimental import pallas as pl
from jax.experimental.pallas import tpu as pltpu


_GRANULE = 32  # 32-align M tiles: covers the sublane granule of f32 (8), bf16 (16), int8 (32)


def _round_up(v, g):
    return -(-v // g) * g


def _classifier_kernel(x_ref, w_ref, b_ref, mask_ref, out_ref):
    # x_ref:    [TILE_M, H]   native dtype (f32 or bf16)
    # w_ref:    [H, 1]        same dtype as x; constant index_map -> VMEM-resident
    # b_ref:    [1]           f32 scalar in SMEM
    # mask_ref: [TILE_M, 1]   narrow dtype (e.g. int8); cast to f32 on the VPU
    # out_ref:  [TILE_M, 1]   f32
    h = jnp.dot(x_ref[...], w_ref[...], preferred_element_type=jnp.float32)
    h = h + b_ref[0]
    # sigmoid(h) = 1 / (1 + exp(-h)); approx reciprocal uses the otherwise-idle EUP slot.
    s = pl.reciprocal(1.0 + jnp.exp(-h), approx=True)
    out_ref[...] = s * mask_ref[...].astype(jnp.float32)


def _device_kind():
    try:
        return jax.devices()[0].device_kind.lower()
    except Exception:
        return ""


def _is_v7x(kind):
    return ("v7" in kind) or ("tpu7" in kind)


def _per_buffer_budget_bytes(kind):
    """Per-pipeline-buffer VMEM budget for the M-tiled operands (x + mask + out)."""
    if "v6" in kind:
        return 14 << 20      # v6e: 128 MiB physical VMEM; fewer grid steps at 1.4 TB/s
    if _is_v7x(kind):
        return 10 << 20      # v7x: 64 MiB physical per TC; big tiles matter most at 3.2 TB/s
    return 6 << 20           # v5e & unknown: per-step overhead already <5% at this size


def _choose_tile_m(m, h, x_itemsize, mask_itemsize, budget_bytes, multi_core):
    """Largest 32-aligned M tile whose lane-padded per-buffer VMEM footprint fits budget."""
    h_pad = _round_up(h, 128)
    # Per-row VMEM bytes across all M-tiled operands; (TILE_M, 1) blocks pad lanes to 128.
    row_bytes = h_pad * x_itemsize + 128 * max(1, mask_itemsize) + 128 * 4
    full = _round_up(m, _GRANULE)
    cap = max(_GRANULE, (budget_bytes // row_bytes) // _GRANULE * _GRANULE)
    tile = min(full, cap)
    if multi_core:
        steps = -(-full // tile)
        if steps == 1 and full > _GRANULE:
            # Split so the "parallel" M axis can feed both TensorCores.
            tile = _round_up(-(-full // 2), _GRANULE)
        elif steps > 1 and steps % 2 == 1:
            tile = max(_GRANULE, _round_up(-(-full // (steps + 1)), _GRANULE))
    return tile


def _padded_vmem_bytes(rows, cols, itemsize):
    sub = {1: 32, 2: 16}.get(itemsize, 8)
    return _round_up(rows, sub) * _round_up(cols, 128) * itemsize


def _vmem_limit_bytes(tile_m, h, x_itemsize, mask_itemsize):
    """Explicit scoped-VMEM limit matching the chosen tiles (2-deep pipeline + headroom)."""
    per_buf = (_padded_vmem_bytes(tile_m, h, x_itemsize)
               + _padded_vmem_bytes(tile_m, 1, mask_itemsize)
               + _padded_vmem_bytes(tile_m, 1, 4))
    w_bytes = _padded_vmem_bytes(h, 1, x_itemsize)
    total = 2 * per_buf + 2 * w_bytes + (2 << 20)   # double-buffers + internal scratch headroom
    return int(max(total, 16 << 20))                # floor at the smallest default scoped limit


def classifier_forward(x, mask_cls, weight, bias):
    """
    x:        [B, S, H]  (f32 or bf16 -- passed through in its native dtype)
    mask_cls: [B, S]     any numeric/bool-ish dtype (cast to f32 inside kernel)
    weight:   [H]        row of the [1, H] PyTorch Linear weight
    bias:     scalar
    returns:  [B, S] f32 == sigmoid(x @ W^T + b).squeeze(-1) * mask_cls.float()
    """
    B, S, H = x.shape
    M = B * S

    x2 = x.reshape(M, H)                                # metadata-only reshape, no cast
    w2 = weight.reshape(H, 1).astype(x2.dtype)          # tiny; match x for native MXU dtype
    b1 = jnp.asarray(bias, jnp.float32).reshape(1)      # SMEM scalar
    m2 = mask_cls.reshape(M, 1)                         # keep narrow dtype; cast in kernel

    x_it = jnp.dtype(x2.dtype).itemsize
    mask_it = jnp.dtype(m2.dtype).itemsize

    kind = _device_kind()
    tile_m = _choose_tile_m(M, H, x_it, mask_it,
                            _per_buffer_budget_bytes(kind), multi_core=_is_v7x(kind))
    grid = (pl.cdiv(M, tile_m),)
    vmem_limit = _vmem_limit_bytes(tile_m, H, x_it, mask_it)

    cost = pl.CostEstimate(
        flops=2 * M * H + 3 * M,
        transcendentals=2 * M,                          # exp + approx reciprocal per row
        bytes_accessed=M * H * x_it + M * mask_it + M * 4 + H * x_it + 4,
    )

    out = pl.pallas_call(
        _classifier_kernel,
        out_shape=jax.ShapeDtypeStruct((M, 1), jnp.float32),
        grid=grid,
        in_specs=[
            pl.BlockSpec((tile_m, H), lambda i: (i, 0)),   # x: tiled over M, auto double-buffered
            pl.BlockSpec((H, 1), lambda i: (0, 0)),        # w: constant index -> stays resident
            pl.BlockSpec(memory_space=pltpu.SMEM),         # bias scalar
            pl.BlockSpec((tile_m, 1), lambda i: (i, 0)),   # mask: tiled over M
        ],
        out_specs=pl.BlockSpec((tile_m, 1), lambda i: (i, 0)),
        compiler_params=pltpu.CompilerParams(
            dimension_semantics=("parallel",),             # lets v7x shard M over its 2 TCs
            vmem_limit_bytes=vmem_limit,                   # explicit, matched to the tiles
        ),
        cost_estimate=cost,
    )(x2, w2, b1, m2)

    return out.reshape(B, S)


def _reference(x, mask_cls, weight, bias):
    h = jnp.einsum("bsh,h->bs", x, weight) + bias
    return jax.nn.sigmoid(h) * mask_cls.astype(jnp.float32)


if __name__ == "__main__":
    B, S, H = 2, 16, 32  # batch, num sentences (seq), hidden_size

    key = jax.random.PRNGKey(0)
    kx, kw, kb, km = jax.random.split(key, 4)

    x = jax.random.normal(kx, (B, S, H), dtype=jnp.float32)
    # Deterministic "Linear(hidden_size, 1)" params (synthetic init, not a checkpoint).
    bound = 1.0 / (H ** 0.5)
    weight = jax.random.uniform(kw, (H,), jnp.float32, -bound, bound)
    bias = jax.random.uniform(kb, (), jnp.float32, -bound, bound)
    # mask_cls: binary sentence mask kept in a narrow dtype (cast happens in-kernel).
    mask_cls = (jax.random.uniform(km, (B, S)) > 0.3).astype(jnp.int8)

    # float32 activations (approx-reciprocal sigmoid -> allow a few-ULP EUP error).
    out = jax.block_until_ready(classifier_forward(x, mask_cls, weight, bias))
    ref = _reference(x, mask_cls, weight, bias)
    assert out.shape == (B, S)
    assert out.dtype == jnp.float32
    assert jnp.allclose(out, ref, atol=2e-3, rtol=2e-3), "f32 mismatch vs reference"

    # bfloat16 activations: passed through with no wrapper upcast (half the HBM bytes).
    x_bf = x.astype(jnp.bfloat16)
    out_bf = jax.block_until_ready(classifier_forward(x_bf, mask_cls, weight, bias))
    ref_bf = _reference(
        x_bf.astype(jnp.float32),
        mask_cls,
        weight.astype(jnp.bfloat16).astype(jnp.float32),
        bias,
    )
    assert jnp.allclose(out_bf, ref_bf, atol=2e-2, rtol=2e-2), "bf16 mismatch vs reference"

    print("KERNEL_OK")
</pallas_src>

<mosaic_0001>
module attributes {stable_mosaic.version = 11 : i64} {
  func.func @_classifier_kernel(%arg0: i32, %arg1: memref<32x32xf32, #tpu.memory_space<vmem>>, %arg2: memref<32x1xf32, #tpu.memory_space<vmem>>, %arg3: memref<1xf32, #tpu.memory_space<smem>>, %arg4: memref<32x1xi8, #tpu.memory_space<vmem>>, %arg5: memref<32x1xf32, #tpu.memory_space<vmem>>) attributes {dimension_semantics = [#tpu.dimension_semantics<parallel>], iteration_bounds = array<i64: 1>, scalar_prefetch = 0 : i64, scratch_operands = 0 : i64, tpu.core_type = #tpu.core_type<tc>, window_params = [{transform_indices = @transform_0, window_bounds = array<i64: 32, 32>}, {pipeline_mode = #tpu.pipeline_mode<synchronous>, transform_indices = @transform_1, window_bounds = array<i64: 32, 1>}, {transform_indices = @transform_2, window_bounds = array<i64: 1>}, {transform_indices = @transform_3, window_bounds = array<i64: 32, 1>}, {transform_indices = @transform_4, window_bounds = array<i64: 32, 1>}]} {
    %c0 = arith.constant 0 : index
    %c0_0 = arith.constant 0 : index
    %0 = vector.load %arg1[%c0, %c0_0] : memref<32x32xf32, #tpu.memory_space<vmem>>, vector<32x32xf32>
    %c0_1 = arith.constant 0 : index
    %c0_2 = arith.constant 0 : index
    %1 = vector.load %arg2[%c0_1, %c0_2] : memref<32x1xf32, #tpu.memory_space<vmem>>, vector<32x1xf32>
    %cst = arith.constant dense<0.000000e+00> : vector<32x1xf32>
    %2 = tpu.matmul %0, %1, %cst {dimension_numbers = #tpu.dot_dimension_numbers<[1], [0], [0], [1], [0, 0, 1, 1], [], []>} : vector<32x32xf32>, vector<32x1xf32>, vector<32x1xf32> -> vector<32x1xf32>
    %c0_3 = arith.constant 0 : index
    %3 = memref.load %arg3[%c0_3] : memref<1xf32, #tpu.memory_space<smem>>
    %4 = vector.broadcast %3 : f32 to vector<32x1xf32>
    %5 = arith.addf %2, %4 : vector<32x1xf32>
    %cst_4 = arith.constant 0.000000e+00 : f32
    %6 = vector.broadcast %cst_4 : f32 to vector<32x1xf32>
    %7 = arith.subf %6, %5 : vector<32x1xf32>
    %8 = math.exp %7 : vector<32x1xf32>
    %cst_5 = arith.constant 1.000000e+00 : f32
    %9 = vector.broadcast %cst_5 : f32 to vector<32x1xf32>
    %10 = arith.addf %9, %8 : vector<32x1xf32>
    %11 = tpu.reciprocal %10 {approx = true} : vector<32x1xf32> -> vector<32x1xf32>
    %c0_6 = arith.constant 0 : index
    %c0_7 = arith.constant 0 : index
    %12 = vector.load %arg4[%c0_6, %c0_7] : memref<32x1xi8, #tpu.memory_space<vmem>>, vector<32x1xi8>
    %13 = arith.sitofp %12 : vector<32x1xi8> to vector<32x1xf32>
    %14 = arith.mulf %11, %13 : vector<32x1xf32>
    %c0_8 = arith.constant 0 : index
    %c0_9 = arith.constant 0 : index
    %15 = vector.load %arg5[%c0_8, %c0_9] : memref<32x1xf32, #tpu.memory_space<vmem>>, vector<32x1xf32>
    tpu.vector_store %arg5[%c0_8, %c0_9], %14 {strides = array<i32>} : memref<32x1xf32, #tpu.memory_space<vmem>>, vector<32x1xf32>,
    return
  }
  func.func @transform_0(%arg0: i32) -> (i32, i32) {
    %c0_i32 = arith.constant 0 : i32
    %c0_i32_0 = arith.constant 0 : i32
    return %arg0, %c0_i32 : i32, i32
  }
  func.func @transform_1(%arg0: i32) -> (i32, i32) {
    %c0_i32 = arith.constant 0 : i32
    %c0_i32_0 = arith.constant 0 : i32
    %c0_i32_1 = arith.constant 0 : i32
    return %c0_i32, %c0_i32_0 : i32, i32
  }
  func.func @transform_2(%arg0: i32) -> i32 {
    %c0_i32 = arith.constant 0 : i32
    %c0_i32_0 = arith.constant 0 : i32
    return %c0_i32 : i32
  }
  func.func @transform_3(%arg0: i32) -> (i32, i32) {
    %c0_i32 = arith.constant 0 : i32
    %c0_i32_0 = arith.constant 0 : i32
    return %arg0, %c0_i32 : i32, i32
  }
  func.func @transform_4(%arg0: i32) -> (i32, i32) {
    %c0_i32 = arith.constant 0 : i32
    %c0_i32_0 = arith.constant 0 : i32
    return %arg0, %c0_i32 : i32, i32
  }
}

</mosaic_0001>

<llo_original>
// kernel: tpu_custom_call.1
$region0: #{tpu_custom_call.1}
  #allocation0 [shape = 'u32[]', space=smem, size = 0x4, offset = 0x4, fixed_abs, tag = 'smem constant byte address 0x4 - core index']
  #allocation1 [shape = 'u32[144,128]{1,0:T(1,128)}', space=vmem, size = 0x12000, scoped, tag = 'internal scratch']
  #allocation2 [shape = 'f32[1]{0:T(128)S(6)}', space=smem, size = 0x200, scoped, tag = 'scoped memory for tpu_custom_call.1']
  %s0 = inlined_call_operand.vmem [shape: f32[32,32], index: 0, kind: input, shape index: {}]
  %s1 = inlined_call_operand.vmem [shape: f32[32,1], index: 1, kind: input, shape index: {}]
  %s2 = inlined_call_operand.<no memory space> [shape: f32[1], index: 2, kind: input, shape index: {}]
  %s3 = inlined_call_operand.vmem [shape: s8[32,1], index: 3, kind: input, shape index: {}]
  %s4 = inlined_call_operand.vmem [shape: f32[32,1], index: 4, kind: output, shape index: {}]
  %s5 = sld [smem:[#allocation0]]
  $region26: #{tpu_custom_call.1} parent=0
    _
  %s7 = ssub.s32 1, %s5
  %s8 = scalar_select 0, %s7, %s5
  %9 = sst [smem:[#allocation2]] %s2
  // Predicated region
  $region2: #{tpu_custom_call.1} parent=0 // pred_check
    _
  $region3: #{tpu_custom_call.1} parent=0 // pred_check_branch
    %11 = sbr.rel (0) target = $region5
  $region4: #{tpu_custom_call.1} parent=0 // pred_region
    _
  $region5: #{tpu_custom_call.1} parent=0 // pred_fallthru
    _
  // Predicated region
  $region6: #{tpu_custom_call.1} parent=0 // pred_check
    _
  $region7: #{tpu_custom_call.1} parent=0 // pred_check_branch
    %13 = sbr.rel (0) target = $region9
  $region8: #{tpu_custom_call.1} parent=0 // pred_region
    _
  $region9: #{tpu_custom_call.1} parent=0 // pred_fallthru
    _
  // Predicated region
  $region10: #{tpu_custom_call.1} parent=0 // pred_check
    _
  $region11: #{tpu_custom_call.1} parent=0 // pred_check_branch
    %15 = sbr.rel (0) target = $region13
  $region12: #{tpu_custom_call.1} parent=0 // pred_region
    _
  $region13: #{tpu_custom_call.1} parent=0 // pred_fallthru
    _
  // Predicated region
  $region14: #{tpu_custom_call.1} parent=0 // pred_check
    _
  $region15: #{tpu_custom_call.1} parent=0 // pred_check_branch
    %17 = sbr.rel (0) target = $region17
  $region16: #{tpu_custom_call.1} parent=0 // pred_region
    _
  $region17: #{tpu_custom_call.1} parent=0 // pred_fallthru
    _
  %v18 = vld [vmem:[%s0] sm:$0xff]
  %v19 = vld [vmem:[%s0 + $0x8] sm:$0xff]
  %v20 = vld [vmem:[%s0 + $0x10] sm:$0xff]
  %v21 = vld [vmem:[%s0 + $0x18] sm:$0xff]
  %v22 = vld [vmem:[%s1] sm:$0xff]
  %v23 = vld [vmem:[%s1 + $0x8] sm:$0xff]
  %v24 = vld [vmem:[%s1 + $0x10] sm:$0xff]
  %v25 = vld [vmem:[%s1 + $0x18] sm:$0xff]
  %s26 = sld [smem:[#allocation2]]
  %v27 = vstv %s26
  %vm28 = vcmask 261120
  %v30 = vsel %vm28, %v18, 0
  %v33 = vsel %vm28, %v19, 0
  %v36 = vsel %vm28, %v20, 0
  %v39 = vsel %vm28, %v21, 0
  %41 = vmatprep.subr.mxu0 0.0
  %42 = vmatpush1.msra.mxu0 0.0
  %43 = vmatprep.subr.mxu0 0.0
  %44 = vmatpush1.msra.mxu0 0.0
  %45 = vmatprep.subr.mxu0 0.0
  %46 = vmatpush1.msra.mxu0 0.0
  %47 = vmatprep.subr.mxu0 0.0
  %48 = vmatpush1.msra.mxu0 0.0
  %49 = vmatprep.subr.mxu0 0.0
  %50 = vmatpush1.msra.mxu0 0.0
  %51 = vmatprep.subr.mxu0 0.0
  %52 = vmatpush1.msra.mxu0 0.0
  %53 = vmatprep.subr.mxu0 0.0
  %54 = vmatpush1.msra.mxu0 0.0
  %55 = vmatprep.subr.mxu0 0.0
  %56 = vmatpush1.msra.mxu0 0.0
  %57 = vmatprep.subr.mxu0 0.0
  %58 = vmatpush1.msra.mxu0 0.0
  %59 = vmatprep.subr.mxu0 0.0
  %60 = vmatpush1.msra.mxu0 0.0
  %61 = vmatprep.subr.mxu0 0.0
  %62 = vmatpush1.msra.mxu0 0.0
  %63 = vmatprep.subr.mxu0 0.0
  %64 = vmatpush1.msra.mxu0 0.0
  %65 = vmatprep.subr.mxu0 0.0
  %66 = vmatpush1.msra.mxu0 %v25
  %67 = vmatprep.subr.mxu0 0.0
  %68 = vmatpush1.msra.mxu0 %v24
  %69 = vmatprep.subr.mxu0 0.0
  %70 = vmatpush1.msra.mxu0 %v23
  %71 = vmatprep.subr.mxu0 0.0
  %72 = vmatpush1.msra.mxu0 %v22
  %73 = vmatprep.subr.mxu0 0.0
  %74 = vmatpush2.msra.mxu0 0.0
  %75 = vmatprep.subr.mxu0 0.0
  %76 = vmatpush2.msra.mxu0 0.0
  %77 = vmatprep.subr.mxu0 0.0
  %78 = vmatpush2.msra.mxu0 0.0
  %79 = vmatprep.subr.mxu0 0.0
  %80 = vmatpush2.msra.mxu0 0.0
  %81 = vmatprep.subr.mxu0 0.0
  %82 = vmatpush2.msra.mxu0 0.0
  %83 = vmatprep.subr.mxu0 0.0
  %84 = vmatpush2.msra.mxu0 0.0
  %85 = vmatprep.subr.mxu0 0.0
  %86 = vmatpush2.msra.mxu0 0.0
  %87 = vmatprep.subr.mxu0 0.0
  %88 = vmatpush2.msra.mxu0 0.0
  %89 = vmatprep.subr.mxu0 0.0
  %90 = vmatpush2.msra.mxu0 0.0
  %91 = vmatprep.subr.mxu0 0.0
  %92 = vmatpush2.msra.mxu0 0.0
  %93 = vmatprep.subr.mxu0 0.0
  %94 = vmatpush2.msra.mxu0 0.0
  %95 = vmatprep.subr.mxu0 0.0
  %96 = vmatpush2.msra.mxu0 0.0
  %97 = vmatprep.subr.mxu0 0.0
  %98 = vmatpush2.msra.mxu0 0.0
  %99 = vmatprep.subr.mxu0 0.0
  %100 = vmatpush2.msra.mxu0 0.0
  %101 = vmatprep.subr.mxu0 0.0
  %102 = vmatpush2.msra.mxu0 0.0
  %103 = vmatprep.subr.mxu0 0.0
  %104 = vmatpush2.msra.mxu0 0.0
  %105 = vmatprep.mubr.f32.mxu0 0.0
  %106 = vmatmul.mubr.f32.gmra.mxu0 %v30
  %v107 = vpop.f32.mrf.mxu0
  %v108 = vadd.f32 %v27, %v107
  %v109 = vpop.f32.mrf.mxu0
  %110 = vmatprep.mubr.f32.mxu0 0.0
  %111 = vmatmul.mubr.f32.gmra.mxu0 %v33
  %v112 = vpop.f32.mrf.mxu0
  %v113 = vadd.f32 %v27, %v112
  %v114 = vpop.f32.mrf.mxu0
  %115 = vmatprep.mubr.f32.mxu0 0.0
  %116 = vmatmul.mubr.f32.gmra.mxu0 %v36
  %v117 = vpop.f32.mrf.mxu0
  %v118 = vadd.f32 %v27, %v117
  %v119 = vpop.f32.mrf.mxu0
  %120 = vmatprep.mubr.f32.mxu0 0.0
  %121 = vmatmul.mubr.f32.gmra.mxu0 %v39
  %v122 = vpop.f32.mrf.mxu0
  %v123 = vadd.f32 %v27, %v122
  %v124 = vpop.f32.mrf.mxu0
  %125 = vdwg.mxu0
  %v126 = vsub.f32 0.0, %v108
  %v127 = vsub.f32 0.0, %v113
  %v128 = vsub.f32 0.0, %v118
  %v129 = vsub.f32 0.0, %v123
  %v130 = vmul.f32 %v126, 1.442695
  %v131 = vpow.pop %v130
  %v132 = vmul.f32 %v127, 1.442695
  %v133 = vpow.pop %v132
  %v134 = vmul.f32 %v128, 1.442695
  %v135 = vpow.pop %v134
  %v136 = vmul.f32 %v129, 1.442695
  %v137 = vpow.pop %v136
  %v138 = vadd.f32 %v131, 1.0
  %v139 = vadd.f32 %v133, 1.0
  %v140 = vadd.f32 %v135, 1.0
  %v141 = vadd.f32 %v137, 1.0
  %v142 = vrcp.pop %v138
  %v143 = vrcp.pop %v139
  %v144 = vrcp.pop %v140
  %v145 = vrcp.pop %v141
  %v146 = vld [vmem:[%s3] sm:$0x3]
  %v147 = vld [vmem:[%s3 + $0x2] sm:$0x3]
  %v148 = vld [vmem:[%s3 + $0x4] sm:$0x3]
  %v149 = vld [vmem:[%s3 + $0x6] sm:$0x3]
  %v150 = vunpack.c.0.s8 %v146
  %v151 = vunpack.c.0.s8 %v147
  %v152 = vunpack.c.0.s8 %v148
  %v153 = vunpack.c.0.s8 %v149
  %v154 = vcvt.s32.f32 %v150
  %v155 = vcvt.s32.f32 %v151
  %v156 = vcvt.s32.f32 %v152
  %v157 = vcvt.s32.f32 %v153
  %v158 = vmul.f32 %v142, %v154
  %v159 = vmul.f32 %v143, %v155
  %v160 = vmul.f32 %v144, %v156
  %v161 = vmul.f32 %v145, %v157
  %vm162 = vcmask 7168
  %163 = vst.msk [vmem:[%s4] sm:$0xff] %vm162, %v158
  %164 = vst.msk [vmem:[%s4 + $0x8] sm:$0xff] %vm162, %v159
  %165 = vst.msk [vmem:[%s4 + $0x10] sm:$0xff] %vm162, %v160
  %166 = vst.msk [vmem:[%s4 + $0x18] sm:$0xff] %vm162, %v161
  // Predicated region
  $region18: #{tpu_custom_call.1} parent=0 // pred_check
    _
  $region19: #{tpu_custom_call.1} parent=0 // pred_check_branch
    %168 = sbr.rel (0) target = $region21
  $region20: #{tpu_custom_call.1} parent=0 // pred_region
    _
  $region21: #{tpu_custom_call.1} parent=0 // pred_fallthru
    _
  // Predicated region
  $region22: #{tpu_custom_call.1} parent=0 // pred_check
    _
  $region23: #{tpu_custom_call.1} parent=0 // pred_check_branch
    %170 = sbr.rel (0) target = $region25
  $region24: #{tpu_custom_call.1} parent=0 // pred_region
    _
  $region25: #{tpu_custom_call.1} parent=0 // pred_fallthru
    _

</llo_original>
